<compile_context>
chip_gen: v6e
topology: v6e:2x2x1
jax: 0.10.0
libtpu: 0.0.40
codegen_flags: <defaults>
</compile_context>

<pallas_src>
import math
from itertools import combinations

import jax
import jax.numpy as jnp
from jax.experimental import pallas as pl
from jax.experimental.pallas import tpu as pltpu


def _round_up(x, m):
    return ((x + m - 1) // m) * m


def _linear_kernel(x_ref, wt_ref, b_ref, out_ref):
    # x: (tm, K), wt: (K, H) -- pre-transposed wrapper-side (no .T in kernel)
    out_ref[...] = (jnp.dot(x_ref[...], wt_ref[...],
                            preferred_element_type=jnp.float32)
                    + b_ref[...])


def _linear_relu_kernel(x_ref, wt_ref, b_ref, out_ref):
    y = (jnp.dot(x_ref[...], wt_ref[...],
                 preferred_element_type=jnp.float32) + b_ref[...])
    out_ref[...] = jnp.maximum(y, 0.0)


def _pallas_linear(x, w, b, *, relu, block_m=256):
    """y = x @ w.T + b (optionally ReLU).  x: (M, K), w: (H, K), b: (H,)."""
    x = jnp.asarray(x, jnp.float32)
    M, K = x.shape
    H, K2 = w.shape
    assert K == K2, (K, K2)

    wt = jnp.asarray(w, jnp.float32).T            # (K, H): transpose once, outside
    b2 = jnp.asarray(b, jnp.float32).reshape(1, H)

    # Tile only the row (M) dimension; keep K and H as full (lane-dense) blocks.
    tm = min(block_m, _round_up(M, 8))
    Mp = _round_up(M, tm)
    if Mp != M:
        x = jnp.pad(x, ((0, Mp - M), (0, 0)))

    kernel = _linear_relu_kernel if relu else _linear_kernel
    cost = pl.CostEstimate(
        flops=2 * Mp * K * H,
        transcendentals=0,
        bytes_accessed=4 * (Mp * K + K * H + H + Mp * H),
    )

    out = pl.pallas_call(
        kernel,
        out_shape=jax.ShapeDtypeStruct((Mp, H), jnp.float32),
        grid=(Mp // tm,),
        in_specs=[
            pl.BlockSpec((tm, K), lambda i: (i, 0)),   # activations (tiled rows)
            pl.BlockSpec((K, H), lambda i: (0, 0)),    # pre-transposed weight
            pl.BlockSpec((1, H), lambda i: (0, 0)),    # bias
        ],
        out_specs=pl.BlockSpec((tm, H), lambda i: (i, 0)),
        compiler_params=pltpu.CompilerParams(
            dimension_semantics=("parallel",)),
        cost_estimate=cost,
    )(x, wt, b2)
    return out[:M]


def adv_domain_cls_base_forward(input_data, beta, params, cfg):
    """Forward pass of AdvDomainClsBase.

    GradRevLayer is the identity in the forward pass (beta only scales the
    backward gradient), so `beta` is accepted but unused here.
    """
    del beta  # gradient-reversal: forward identity
    feat = jnp.asarray(input_data, jnp.float32)
    lead_shape = feat.shape[:-1]
    feat = feat.reshape(-1, feat.shape[-1])
    ssl2 = (cfg['type_adv'] == 'video'
            and cfg['DA_adv_video'] == 'rev_grad_ssl_2')

    if ssl2:
        nf = cfg['num_f_maps']
        num_seg = feat.shape[-1] // nf
        feat = feat.reshape(-1, num_seg, nf)
        if cfg['pair_ssl'] == 'adjacent':
            id_pair = [(i, i + 1) for i in range(num_seg - 1)]
        else:
            id_pair = list(combinations(range(num_seg), 2))
        idx = jnp.asarray(id_pair, jnp.int32).reshape(-1)   # static gather idx
        feat = jnp.take(feat, idx, axis=1)                  # (B, 2P, nf) glue
        feat = feat.reshape(-1, 2 * nf)
        feat = _pallas_linear(feat, params['w_pair'], params['b_pair'],
                              relu=False)                   # fc_pair
        feat = feat.reshape(-1, len(id_pair) * nf)

    feat = _pallas_linear(feat, params['w1'], params['b1'], relu=True)  # fc1+ReLU
    # TODO(synk): nn.Dropout() is stochastic in training mode; treated here as
    # inference-mode identity (no masking / scaling).

    if ssl2:
        return feat                                  # module returns (-1, hidden)
    return feat.reshape(*lead_shape, -1)


def adv_domain_cls_base_ref(input_data, beta, params, cfg):
    """Pure-JAX reference mirroring the PyTorch forward exactly (eval mode)."""
    del beta
    feat = jnp.asarray(input_data, jnp.float32)
    lead_shape = feat.shape[:-1]
    feat = feat.reshape(-1, feat.shape[-1])
    ssl2 = (cfg['type_adv'] == 'video'
            and cfg['DA_adv_video'] == 'rev_grad_ssl_2')

    if ssl2:
        nf = cfg['num_f_maps']
        num_seg = feat.shape[-1] // nf
        feat = feat.reshape(-1, num_seg, nf)
        if cfg['pair_ssl'] == 'adjacent':
            id_pair = [(i, i + 1) for i in range(num_seg - 1)]
        else:
            id_pair = list(combinations(range(num_seg), 2))
        idx = jnp.asarray(id_pair, jnp.int32)
        feat = feat[:, idx, :]                       # (B, P, 2, nf)
        feat = feat.reshape(-1, 2 * nf)
        feat = feat @ params['w_pair'].T + params['b_pair']
        feat = feat.reshape(-1, len(id_pair) * nf)

    feat = feat @ params['w1'].T + params['b1']
    feat = jnp.maximum(feat, 0.0)
    if ssl2:
        return feat
    return feat.reshape(*lead_shape, -1)


if __name__ == "__main__":
    key = jax.random.PRNGKey(0)
    beta = 0.5

    # ---- case 1: standard frame-level adversarial head (fc1 + ReLU) --------
    in_feat, hidden = 64, 32
    B, T = 2, 16                                     # 32 rows after flattening
    k1, k2, k3, key = jax.random.split(key, 4)
    x = jax.random.normal(k1, (B, T, in_feat), jnp.float32)
    s = 1.0 / math.sqrt(in_feat)
    params = {
        'w1': jax.random.uniform(k2, (hidden, in_feat), jnp.float32, -s, s),
        'b1': jax.random.uniform(k3, (hidden,), jnp.float32, -s, s),
    }
    cfg = dict(type_adv='frame', DA_adv_video='rev_grad', pair_ssl='all',
               num_f_maps=16)

    out = adv_domain_cls_base_forward(x, beta, params, cfg)
    out = jax.block_until_ready(out)
    ref = adv_domain_cls_base_ref(x, beta, params, cfg)
    assert out.shape == (B, T, hidden)
    assert jnp.allclose(out, ref, atol=1e-4, rtol=1e-4)

    # ---- case 2: video-level head with pairwise SSL ('rev_grad_ssl_2') ----
    num_f_maps, num_seg, hidden2 = 16, 4, 32
    num_pairs = num_seg * (num_seg - 1) // 2         # 6 pairs (combinations)
    k1, k2, k3, k4, k5, key = jax.random.split(key, 6)
    xv = jax.random.normal(k1, (3, num_seg * num_f_maps), jnp.float32)
    sp = 1.0 / math.sqrt(2 * num_f_maps)
    s1 = 1.0 / math.sqrt(num_pairs * num_f_maps)
    params_v = {
        'w_pair': jax.random.uniform(k2, (num_f_maps, 2 * num_f_maps),
                                     jnp.float32, -sp, sp),
        'b_pair': jax.random.uniform(k3, (num_f_maps,), jnp.float32, -sp, sp),
        'w1': jax.random.uniform(k4, (hidden2, num_pairs * num_f_maps),
                                 jnp.float32, -s1, s1),
        'b1': jax.random.uniform(k5, (hidden2,), jnp.float32, -s1, s1),
    }
    cfg_v = dict(type_adv='video', DA_adv_video='rev_grad_ssl_2',
                 pair_ssl='all', num_f_maps=num_f_maps)

    out_v = adv_domain_cls_base_forward(xv, beta, params_v, cfg_v)
    out_v = jax.block_until_ready(out_v)
    ref_v = adv_domain_cls_base_ref(xv, beta, params_v, cfg_v)
    assert out_v.shape == (3, hidden2)
    assert jnp.allclose(out_v, ref_v, atol=1e-4, rtol=1e-4)

    print("KERNEL_OK")
</pallas_src>

<mosaic_0001>
module attributes {stable_mosaic.version = 11 : i64} {
  func.func @_linear_relu_kernel(%arg0: i32, %arg1: memref<32x64xf32, #tpu.memory_space<vmem>>, %arg2: memref<64x32xf32, #tpu.memory_space<vmem>>, %arg3: memref<1x32xf32, #tpu.memory_space<vmem>>, %arg4: memref<32x32xf32, #tpu.memory_space<vmem>>) attributes {dimension_semantics = [#tpu.dimension_semantics<parallel>], iteration_bounds = array<i64: 1>, scalar_prefetch = 0 : i64, scratch_operands = 0 : i64, tpu.core_type = #tpu.core_type<tc>, window_params = [{transform_indices = @transform_0, window_bounds = array<i64: 32, 64>}, {pipeline_mode = #tpu.pipeline_mode<synchronous>, transform_indices = @transform_1, window_bounds = array<i64: 64, 32>}, {pipeline_mode = #tpu.pipeline_mode<synchronous>, transform_indices = @transform_2, window_bounds = array<i64: 1, 32>}, {transform_indices = @transform_3, window_bounds = array<i64: 32, 32>}]} {
    %c0 = arith.constant 0 : index
    %c0_0 = arith.constant 0 : index
    %0 = vector.load %arg1[%c0, %c0_0] : memref<32x64xf32, #tpu.memory_space<vmem>>, vector<32x64xf32>
    %c0_1 = arith.constant 0 : index
    %c0_2 = arith.constant 0 : index
    %1 = vector.load %arg2[%c0_1, %c0_2] : memref<64x32xf32, #tpu.memory_space<vmem>>, vector<64x32xf32>
    %cst = arith.constant dense<0.000000e+00> : vector<32x32xf32>
    %2 = tpu.matmul %0, %1, %cst {dimension_numbers = #tpu.dot_dimension_numbers<[1], [0], [0], [1], [0, 0, 1, 1], [], []>} : vector<32x64xf32>, vector<64x32xf32>, vector<32x32xf32> -> vector<32x32xf32>
    %c0_3 = arith.constant 0 : index
    %c0_4 = arith.constant 0 : index
    %3 = vector.load %arg3[%c0_3, %c0_4] : memref<1x32xf32, #tpu.memory_space<vmem>>, vector<1x32xf32>
    %4 = vector.broadcast %3 : vector<1x32xf32> to vector<32x32xf32>
    %5 = arith.addf %2, %4 : vector<32x32xf32>
    %cst_5 = arith.constant 0.000000e+00 : f32
    %6 = vector.broadcast %cst_5 : f32 to vector<32x32xf32>
    %7 = arith.maximumf %5, %6 : vector<32x32xf32>
    %c0_6 = arith.constant 0 : index
    %c0_7 = arith.constant 0 : index
    %8 = vector.load %arg4[%c0_6, %c0_7] : memref<32x32xf32, #tpu.memory_space<vmem>>, vector<32x32xf32>
    tpu.vector_store %arg4[%c0_6, %c0_7], %7 {strides = array<i32>} : memref<32x32xf32, #tpu.memory_space<vmem>>, vector<32x32xf32>,
    return
  }
  func.func @transform_0(%arg0: i32) -> (i32, i32) {
    %c0_i32 = arith.constant 0 : i32
    %c0_i32_0 = arith.constant 0 : i32
    return %arg0, %c0_i32 : i32, i32
  }
  func.func @transform_1(%arg0: i32) -> (i32, i32) {
    %c0_i32 = arith.constant 0 : i32
    %c0_i32_0 = arith.constant 0 : i32
    %c0_i32_1 = arith.constant 0 : i32
    return %c0_i32, %c0_i32_0 : i32, i32
  }
  func.func @transform_2(%arg0: i32) -> (i32, i32) {
    %c0_i32 = arith.constant 0 : i32
    %c0_i32_0 = arith.constant 0 : i32
    %c0_i32_1 = arith.constant 0 : i32
    return %c0_i32, %c0_i32_0 : i32, i32
  }
  func.func @transform_3(%arg0: i32) -> (i32, i32) {
    %c0_i32 = arith.constant 0 : i32
    %c0_i32_0 = arith.constant 0 : i32
    return %arg0, %c0_i32 : i32, i32
  }
}

</mosaic_0001>

<llo_original>
// kernel: tpu_custom_call.1
$region0: #{tpu_custom_call.1}
  #allocation0 [shape = 'u32[]', space=smem, size = 0x4, offset = 0x4, fixed_abs, tag = 'smem constant byte address 0x4 - core index']
  #allocation1 [shape = 'u32[144,128]{1,0:T(1,128)}', space=vmem, size = 0x12000, scoped, tag = 'internal scratch']
  %s0 = inlined_call_operand.vmem [shape: f32[32,64], index: 0, kind: input, shape index: {}]
  %s1 = inlined_call_operand.vmem [shape: f32[64,32], index: 1, kind: input, shape index: {}]
  %s2 = inlined_call_operand.vmem [shape: f32[1,32], index: 2, kind: input, shape index: {}]
  %s3 = inlined_call_operand.hbm [shape: f32[32,32], index: 3, kind: output, shape index: {}]
  %s4 = sld [smem:[#allocation0]]
  $region22: #{tpu_custom_call.1} parent=0
    _
  %s6 = ssub.s32 1, %s4
  %s7 = scalar_select 0, %s6, %s4
  $region1: #{tpu_custom_call.1} parent=0
    #allocation2 [shape = 'u8[16384]{0}', space=vmem, size = 0x4000, scoped, tag = 'output window, operand 0, single buffered']
    #allocation3 [shape = 's32[1]{0}', space=sflag, size = 0x4, scoped, tag = 'scoped memory for tpu_custom_call.1']
    %8 = vsyncpa [#allocation3], 0
    // Predicated region
    $region2: #{tpu_custom_call.1} parent=1 // pred_check
      _
    $region3: #{tpu_custom_call.1} parent=1 // pred_check_branch
      %10 = sbr.rel (0) target = $region5
    $region4: #{tpu_custom_call.1} parent=1 // pred_region
      _
    $region5: #{tpu_custom_call.1} parent=1 // pred_fallthru
      _
    // Predicated region
    $region6: #{tpu_custom_call.1} parent=1 // pred_check
      _
    $region7: #{tpu_custom_call.1} parent=1 // pred_check_branch
      %12 = sbr.rel (0) target = $region9
    $region8: #{tpu_custom_call.1} parent=1 // pred_region
      _
    $region9: #{tpu_custom_call.1} parent=1 // pred_fallthru
      _
    // Predicated region
    $region10: #{tpu_custom_call.1} parent=1 // pred_check
      _
    $region11: #{tpu_custom_call.1} parent=1 // pred_check_branch
      %14 = sbr.rel (0) target = $region13
    $region12: #{tpu_custom_call.1} parent=1 // pred_region
      _
    $region13: #{tpu_custom_call.1} parent=1 // pred_fallthru
      _
    %v15 = vld [vmem:[%s0] sm:$0xff]
    %v16 = vld [vmem:[%s0 + $0x8] sm:$0xff]
    %v17 = vld [vmem:[%s0 + $0x10] sm:$0xff]
    %v18 = vld [vmem:[%s0 + $0x18] sm:$0xff]
    %v19 = vld [vmem:[%s1] sm:$0xff]
    %v20 = vld [vmem:[%s1 + $0x8] sm:$0xff]
    %v21 = vld [vmem:[%s1 + $0x10] sm:$0xff]
    %v22 = vld [vmem:[%s1 + $0x18] sm:$0xff]
    %v23 = vld [vmem:[%s1 + $0x20] sm:$0xff]
    %v24 = vld [vmem:[%s1 + $0x28] sm:$0xff]
    %v25 = vld [vmem:[%s1 + $0x30] sm:$0xff]
    %v26 = vld [vmem:[%s1 + $0x38] sm:$0xff]
    %v27 = vld [vmem:[%s2] sm:$0x1]
    %v29 = vlaneseq
    %v30 = vshrl.u32 %v29, 7
    %v31 = vsub.s32 0, %v30
    %v32 = vrot.slane %v27, %v31
    %vm34 = vcmask 523264
    %v36 = vsel %vm34, %v15, 0
    %v39 = vsel %vm34, %v16, 0
    %v42 = vsel %vm34, %v17, 0
    %v45 = vsel %vm34, %v18, 0
    %47 = vmatprep.subr.mxu0 0.0
    %48 = vmatpush1.msra.mxu0 0.0
    %49 = vmatprep.subr.mxu0 0.0
    %50 = vmatpush1.msra.mxu0 0.0
    %51 = vmatprep.subr.mxu0 0.0
    %52 = vmatpush1.msra.mxu0 0.0
    %53 = vmatprep.subr.mxu0 0.0
    %54 = vmatpush1.msra.mxu0 0.0
    %55 = vmatprep.subr.mxu0 0.0
    %56 = vmatpush1.msra.mxu0 0.0
    %57 = vmatprep.subr.mxu0 0.0
    %58 = vmatpush1.msra.mxu0 0.0
    %59 = vmatprep.subr.mxu0 0.0
    %60 = vmatpush1.msra.mxu0 0.0
    %61 = vmatprep.subr.mxu0 0.0
    %62 = vmatpush1.msra.mxu0 0.0
    %63 = vmatprep.subr.mxu0 0.0
    %64 = vmatpush1.msra.mxu0 %v26
    %65 = vmatprep.subr.mxu0 0.0
    %66 = vmatpush1.msra.mxu0 %v25
    %67 = vmatprep.subr.mxu0 0.0
    %68 = vmatpush1.msra.mxu0 %v24
    %69 = vmatprep.subr.mxu0 0.0
    %70 = vmatpush1.msra.mxu0 %v23
    %71 = vmatprep.subr.mxu0 0.0
    %72 = vmatpush1.msra.mxu0 %v22
    %73 = vmatprep.subr.mxu0 0.0
    %74 = vmatpush1.msra.mxu0 %v21
    %75 = vmatprep.subr.mxu0 0.0
    %76 = vmatpush1.msra.mxu0 %v20
    %77 = vmatprep.subr.mxu0 0.0
    %78 = vmatpush1.msra.mxu0 %v19
    %79 = vmatprep.subr.mxu0 0.0
    %80 = vmatpush2.msra.mxu0 0.0
    %81 = vmatprep.subr.mxu0 0.0
    %82 = vmatpush2.msra.mxu0 0.0
    %83 = vmatprep.subr.mxu0 0.0
    %84 = vmatpush2.msra.mxu0 0.0
    %85 = vmatprep.subr.mxu0 0.0
    %86 = vmatpush2.msra.mxu0 0.0
    %87 = vmatprep.subr.mxu0 0.0
    %88 = vmatpush2.msra.mxu0 0.0
    %89 = vmatprep.subr.mxu0 0.0
    %90 = vmatpush2.msra.mxu0 0.0
    %91 = vmatprep.subr.mxu0 0.0
    %92 = vmatpush2.msra.mxu0 0.0
    %93 = vmatprep.subr.mxu0 0.0
    %94 = vmatpush2.msra.mxu0 0.0
    %95 = vmatprep.subr.mxu0 0.0
    %96 = vmatpush2.msra.mxu0 0.0
    %97 = vmatprep.subr.mxu0 0.0
    %98 = vmatpush2.msra.mxu0 0.0
    %99 = vmatprep.subr.mxu0 0.0
    %100 = vmatpush2.msra.mxu0 0.0
    %101 = vmatprep.subr.mxu0 0.0
    %102 = vmatpush2.msra.mxu0 0.0
    %103 = vmatprep.subr.mxu0 0.0
    %104 = vmatpush2.msra.mxu0 0.0
    %105 = vmatprep.subr.mxu0 0.0
    %106 = vmatpush2.msra.mxu0 0.0
    %107 = vmatprep.subr.mxu0 0.0
    %108 = vmatpush2.msra.mxu0 0.0
    %109 = vmatprep.subr.mxu0 0.0
    %110 = vmatpush2.msra.mxu0 0.0
    %111 = vmatprep.mubr.f32.mxu0 0.0
    %112 = vmatmul.mubr.f32.gmra.mxu0 %v36
    %v113 = vpop.f32.mrf.mxu0
    %v114 = vadd.f32 %v32, %v113
    %v115 = vpop.f32.mrf.mxu0
    %116 = vmatprep.mubr.f32.mxu0 0.0
    %117 = vmatmul.mubr.f32.gmra.mxu0 %v39
    %v118 = vpop.f32.mrf.mxu0
    %v119 = vadd.f32 %v32, %v118
    %v120 = vpop.f32.mrf.mxu0
    %121 = vmatprep.mubr.f32.mxu0 0.0
    %122 = vmatmul.mubr.f32.gmra.mxu0 %v42
    %v123 = vpop.f32.mrf.mxu0
    %v124 = vadd.f32 %v32, %v123
    %v125 = vpop.f32.mrf.mxu0
    %126 = vmatprep.mubr.f32.mxu0 0.0
    %127 = vmatmul.mubr.f32.gmra.mxu0 %v45
    %v128 = vpop.f32.mrf.mxu0
    %v129 = vadd.f32 %v32, %v128
    %v130 = vpop.f32.mrf.mxu0
    %131 = vdwg.mxu0
    %v132 = vmax.f32 %v114, 0.0
    %v133 = vmax.f32 %v119, 0.0
    %v134 = vmax.f32 %v124, 0.0
    %v135 = vmax.f32 %v129, 0.0
    %vm136 = vcmask 261120
    %137 = vst.msk [vmem:[#allocation2] sm:$0xff] %vm136, %v132
    %138 = vst.msk [vmem:[#allocation2 + $0x8] sm:$0xff] %vm136, %v133
    %139 = vst.msk [vmem:[#allocation2 + $0x10] sm:$0xff] %vm136, %v134
    %140 = vst.msk [vmem:[#allocation2 + $0x18] sm:$0xff] %vm136, %v135
    // Predicated region
    $region14: #{tpu_custom_call.1} parent=1 // pred_check
      _
    $region15: #{tpu_custom_call.1} parent=1 // pred_check_branch
      %142 = sbr.rel (0) target = $region17
    $region16: #{tpu_custom_call.1} parent=1 // pred_region
      %s144 = ssub.s32 512, 512
      %145 = vsyncadd [#allocation3], %s144
      %s146 = sshll.u32 [#allocation2], 4
      %s147 = int_to_ptr.vmem [resolvable:$true] %s146
      %152 = dma.vmem_to_hbm [thread:$0]  %s147, 512, %s3, [#allocation3], 128, 128, 8
    $region17: #{tpu_custom_call.1} parent=1 // pred_fallthru
      _
    // Predicated region
    $region18: #{tpu_custom_call.1} parent=1 // pred_check
      _
    $region19: #{tpu_custom_call.1} parent=1 // pred_check_branch
      %154 = sbr.rel (0) target = $region21
    $region20: #{tpu_custom_call.1} parent=1 // pred_region
      %155 = dma.done [#allocation3], 512
    $region21: #{tpu_custom_call.1} parent=1 // pred_fallthru
      _
    %156 = vsyncpa [#allocation3], 1

</llo_original>
